<compile_context>
chip_gen: v5e
topology: v5e:2x2
jax: 0.10.0
libtpu: 0.0.40
codegen_flags: <defaults>
</compile_context>

<pallas_src>
import jax
import jax.numpy as jnp
from jax.experimental import pallas as pl
from jax.experimental.pallas import tpu as pltpu


def mean_embedding_kernel(ids_ref, m_ref, b_ref, out_ref):
    ids = ids_ref[...]                                   # (TB, S) int32
    TB, S = ids.shape
    V = m_ref.shape[0]

    # Token-count matrix (TB, V) built with S tiny unrolled compare+add passes
    # (S is static); no 3-D one-hot intermediate.
    vocab_iota = jax.lax.broadcasted_iota(jnp.int32, (TB, V), 1)
    counts = jnp.zeros((TB, V), jnp.float32)
    for s in range(S):
        counts = counts + (ids[:, s:s + 1] == vocab_iota).astype(jnp.float32)

    # Single fused MXU matmul: logits = counts @ ((E @ W)/S) + b.
    # counts are small integers (<= S <= 256) -> exact in bf16; accumulate f32.
    logits = jnp.dot(counts.astype(jnp.bfloat16), m_ref[...],
                     preferred_element_type=jnp.float32) + b_ref[...]  # (TB, C_pad)

    # Softmax over the padded class axis; padded classes have bias -1e30 so
    # exp(logit - m) == 0 and they do not perturb the denominator.
    m = jnp.max(logits, axis=1, keepdims=True)
    e = jnp.exp(logits - m)
    denom = jnp.sum(e, axis=1, keepdims=True)
    # NOTE: approx reciprocal (EUP slot) => rows sum to 1 only to ~1e-3.
    out_ref[...] = e * pl.reciprocal(denom, approx=True)


def prepare_mean_embedding_params(emb_table, w, b, seq_len):
    """One-time 'module init' prep: fold (E @ W)/S, pad to lane-dense C_pad.

    emb_table (V, D) f32; w (D, C) (= torch weight.T); b (1, C) or (C,).
    Returns (m_pad bf16 (V, C_pad), b_pad f32 (1, C_pad), C).
    """
    V, D = emb_table.shape
    C = w.shape[1]
    C_pad = ((C + 127) // 128) * 128
    assert seq_len <= 256, "bf16 counts are exact only for S <= 256"

    m = (emb_table.astype(jnp.float32) @ w.astype(jnp.float32)) * (1.0 / seq_len)
    m_pad = (jnp.zeros((V, C_pad), jnp.float32).at[:, :C].set(m)
             .astype(jnp.bfloat16))
    b_pad = (jnp.full((1, C_pad), -1e30, jnp.float32)
             .at[:, :C].set(jnp.reshape(b, (1, C)).astype(jnp.float32)))
    return m_pad, b_pad, C


def mean_embedding_forward(ids, m_pad, b_pad, n_class, *, batch_tile=128):
    """ids (B, S) int; m_pad (V, C_pad) bf16; b_pad (1, C_pad) f32."""
    B, S = ids.shape
    V, C_pad = m_pad.shape

    TB = min(batch_tile, B)
    # v7x megacore: prefer >= 2 grid steps once the batch is big enough to
    # keep TB >= 64 per step (no effect on single-TC v5e/v6e).
    if B // TB < 2 and B >= 128 and (B // 2) % 8 == 0:
        TB = B // 2
    assert B % TB == 0, "batch must be a multiple of the batch tile"

    out_pad = pl.pallas_call(
        mean_embedding_kernel,
        out_shape=jax.ShapeDtypeStruct((B, C_pad), jnp.float32),
        grid_spec=pltpu.PrefetchScalarGridSpec(
            num_scalar_prefetch=0,
            grid=(B // TB,),
            in_specs=[
                pl.BlockSpec((TB, S), lambda i: (i, 0)),       # ids tile
                pl.BlockSpec((V, C_pad), lambda i: (0, 0),     # folded (E@W)/S
                             pipeline_mode=pl.Buffered(1)),    # grid-invariant
                pl.BlockSpec((1, C_pad), lambda i: (0, 0),     # padded bias
                             pipeline_mode=pl.Buffered(1)),    # grid-invariant
            ],
            out_specs=pl.BlockSpec((TB, C_pad), lambda i: (i, 0)),
        ),
        compiler_params=pltpu.CompilerParams(
            dimension_semantics=("parallel",)),
    )(ids.astype(jnp.int32), m_pad, b_pad)

    return out_pad[:, :n_class]


def mean_embedding_ref(ids, emb_table, w, b):
    emb = jnp.take(emb_table, ids, axis=0)               # (B, S, D)
    x = jnp.mean(emb, axis=1)                            # (B, D)
    logits = x @ w + b                                   # (B, C)
    return jax.nn.softmax(logits, axis=1)


if __name__ == "__main__":
    B, S = 8, 8           # batch, sequence length
    V, D, C = 128, 32, 4  # vocab_size, embedding_dim, n_class

    key = jax.random.PRNGKey(0)
    k_ids, k_emb, k_w, k_b = jax.random.split(key, 4)

    ids = jax.random.randint(k_ids, (B, S), 0, V, dtype=jnp.int32)
    emb_table = jax.random.normal(k_emb, (V, D), dtype=jnp.float32) * 0.1
    w = jax.random.normal(k_w, (D, C), dtype=jnp.float32) * 0.1   # torch weight.T
    b = jax.random.normal(k_b, (1, C), dtype=jnp.float32) * 0.1

    # One-time prep (module init analog): folded E@W/S, lane-dense padding.
    m_pad, b_pad, n_class = prepare_mean_embedding_params(emb_table, w, b, S)
    m_pad, b_pad = jax.block_until_ready((m_pad, b_pad))

    out = mean_embedding_forward(ids, m_pad, b_pad, n_class)
    out = jax.block_until_ready(out)

    ref = mean_embedding_ref(ids, emb_table, w, b)
    assert out.shape == (B, C)
    # Tolerance widened for bf16 matmul operands / approx softmax reciprocal.
    assert jnp.allclose(out, ref, atol=2e-2, rtol=2e-2), "mismatch vs reference"

    print("KERNEL_OK")
</pallas_src>

<mosaic_0001>
module attributes {stable_mosaic.version = 11 : i64} {
  func.func @mean_embedding_kernel(%arg0: i32, %arg1: memref<8x8xi32, #tpu.memory_space<vmem>>, %arg2: memref<128x128xbf16, #tpu.memory_space<vmem>>, %arg3: memref<1x128xf32, #tpu.memory_space<vmem>>, %arg4: memref<8x128xf32, #tpu.memory_space<vmem>>) attributes {dimension_semantics = [#tpu.dimension_semantics<parallel>], iteration_bounds = array<i64: 1>, scalar_prefetch = 0 : i64, scratch_operands = 0 : i64, tpu.core_type = #tpu.core_type<tc>, window_params = [{transform_indices = @transform_0, window_bounds = array<i64: 8, 8>}, {pipeline_mode = #tpu.pipeline_mode<synchronous>, transform_indices = @transform_1, window_bounds = array<i64: 128, 128>}, {pipeline_mode = #tpu.pipeline_mode<synchronous>, transform_indices = @transform_2, window_bounds = array<i64: 1, 128>}, {transform_indices = @transform_3, window_bounds = array<i64: 8, 128>}]} {
    %c0 = arith.constant 0 : index
    %c0_0 = arith.constant 0 : index
    %0 = vector.load %arg1[%c0, %c0_0] : memref<8x8xi32, #tpu.memory_space<vmem>>, vector<8x8xi32>
    %1 = tpu.iota {dimensions = array<i32: 1>} : vector<8x128xi32>
    %cst = arith.constant 0.000000e+00 : f32
    %2 = vector.broadcast %cst : f32 to vector<8x128xf32>
    %3 = vector.extract_strided_slice %0 {offsets = [0, 0], sizes = [8, 1], strides = [1, 1]} : vector<8x8xi32> to vector<8x1xi32>
    %4 = vector.broadcast %3 : vector<8x1xi32> to vector<8x128xi32>
    %5 = arith.cmpi eq, %4, %1 : vector<8x128xi32>
    %6 = arith.extui %5 : vector<8x128xi1> to vector<8x128xi32>
    %7 = arith.sitofp %6 : vector<8x128xi32> to vector<8x128xf32>
    %8 = arith.addf %2, %7 : vector<8x128xf32>
    %9 = vector.extract_strided_slice %0 {offsets = [0, 1], sizes = [8, 1], strides = [1, 1]} : vector<8x8xi32> to vector<8x1xi32>
    %10 = vector.broadcast %9 : vector<8x1xi32> to vector<8x128xi32>
    %11 = arith.cmpi eq, %10, %1 : vector<8x128xi32>
    %12 = arith.extui %11 : vector<8x128xi1> to vector<8x128xi32>
    %13 = arith.sitofp %12 : vector<8x128xi32> to vector<8x128xf32>
    %14 = arith.addf %8, %13 : vector<8x128xf32>
    %15 = vector.extract_strided_slice %0 {offsets = [0, 2], sizes = [8, 1], strides = [1, 1]} : vector<8x8xi32> to vector<8x1xi32>
    %16 = vector.broadcast %15 : vector<8x1xi32> to vector<8x128xi32>
    %17 = arith.cmpi eq, %16, %1 : vector<8x128xi32>
    %18 = arith.extui %17 : vector<8x128xi1> to vector<8x128xi32>
    %19 = arith.sitofp %18 : vector<8x128xi32> to vector<8x128xf32>
    %20 = arith.addf %14, %19 : vector<8x128xf32>
    %21 = vector.extract_strided_slice %0 {offsets = [0, 3], sizes = [8, 1], strides = [1, 1]} : vector<8x8xi32> to vector<8x1xi32>
    %22 = vector.broadcast %21 : vector<8x1xi32> to vector<8x128xi32>
    %23 = arith.cmpi eq, %22, %1 : vector<8x128xi32>
    %24 = arith.extui %23 : vector<8x128xi1> to vector<8x128xi32>
    %25 = arith.sitofp %24 : vector<8x128xi32> to vector<8x128xf32>
    %26 = arith.addf %20, %25 : vector<8x128xf32>
    %27 = vector.extract_strided_slice %0 {offsets = [0, 4], sizes = [8, 1], strides = [1, 1]} : vector<8x8xi32> to vector<8x1xi32>
    %28 = vector.broadcast %27 : vector<8x1xi32> to vector<8x128xi32>
    %29 = arith.cmpi eq, %28, %1 : vector<8x128xi32>
    %30 = arith.extui %29 : vector<8x128xi1> to vector<8x128xi32>
    %31 = arith.sitofp %30 : vector<8x128xi32> to vector<8x128xf32>
    %32 = arith.addf %26, %31 : vector<8x128xf32>
    %33 = vector.extract_strided_slice %0 {offsets = [0, 5], sizes = [8, 1], strides = [1, 1]} : vector<8x8xi32> to vector<8x1xi32>
    %34 = vector.broadcast %33 : vector<8x1xi32> to vector<8x128xi32>
    %35 = arith.cmpi eq, %34, %1 : vector<8x128xi32>
    %36 = arith.extui %35 : vector<8x128xi1> to vector<8x128xi32>
    %37 = arith.sitofp %36 : vector<8x128xi32> to vector<8x128xf32>
    %38 = arith.addf %32, %37 : vector<8x128xf32>
    %39 = vector.extract_strided_slice %0 {offsets = [0, 6], sizes = [8, 1], strides = [1, 1]} : vector<8x8xi32> to vector<8x1xi32>
    %40 = vector.broadcast %39 : vector<8x1xi32> to vector<8x128xi32>
    %41 = arith.cmpi eq, %40, %1 : vector<8x128xi32>
    %42 = arith.extui %41 : vector<8x128xi1> to vector<8x128xi32>
    %43 = arith.sitofp %42 : vector<8x128xi32> to vector<8x128xf32>
    %44 = arith.addf %38, %43 : vector<8x128xf32>
    %45 = vector.extract_strided_slice %0 {offsets = [0, 7], sizes = [8, 1], strides = [1, 1]} : vector<8x8xi32> to vector<8x1xi32>
    %46 = vector.broadcast %45 : vector<8x1xi32> to vector<8x128xi32>
    %47 = arith.cmpi eq, %46, %1 : vector<8x128xi32>
    %48 = arith.extui %47 : vector<8x128xi1> to vector<8x128xi32>
    %49 = arith.sitofp %48 : vector<8x128xi32> to vector<8x128xf32>
    %50 = arith.addf %44, %49 : vector<8x128xf32>
    %51 = arith.truncf %50 : vector<8x128xf32> to vector<8x128xbf16>
    %c0_1 = arith.constant 0 : index
    %c0_2 = arith.constant 0 : index
    %52 = vector.load %arg2[%c0_1, %c0_2] : memref<128x128xbf16, #tpu.memory_space<vmem>>, vector<128x128xbf16>
    %cst_3 = arith.constant dense<0.000000e+00> : vector<8x128xf32>
    %53 = tpu.matmul %51, %52, %cst_3 {dimension_numbers = #tpu.dot_dimension_numbers<[1], [0], [0], [1], [0, 0, 1, 1], [], []>} : vector<8x128xbf16>, vector<128x128xbf16>, vector<8x128xf32> -> vector<8x128xf32>
    %c0_4 = arith.constant 0 : index
    %c0_5 = arith.constant 0 : index
    %54 = vector.load %arg3[%c0_4, %c0_5] : memref<1x128xf32, #tpu.memory_space<vmem>>, vector<1x128xf32>
    %55 = vector.broadcast %54 : vector<1x128xf32> to vector<8x128xf32>
    %56 = arith.addf %53, %55 : vector<8x128xf32>
    %cst_6 = arith.constant dense<0xFF800000> : vector<8xf32>
    %57 = vector.multi_reduction <maximumf>, %56, %cst_6 [1] : vector<8x128xf32> to vector<8xf32>
    %58 = vector.shape_cast %57 : vector<8xf32> to vector<8x1xf32>
    %59 = vector.broadcast %58 : vector<8x1xf32> to vector<8x128xf32>
    %60 = arith.subf %56, %59 : vector<8x128xf32>
    %61 = math.exp %60 : vector<8x128xf32>
    %cst_7 = arith.constant dense<0.000000e+00> : vector<8xf32>
    %62 = vector.multi_reduction <add>, %61, %cst_7 [1] : vector<8x128xf32> to vector<8xf32>
    %63 = vector.shape_cast %62 : vector<8xf32> to vector<8x1xf32>
    %64 = tpu.reciprocal %63 {approx = true} : vector<8x1xf32> -> vector<8x1xf32>
    %65 = vector.broadcast %64 : vector<8x1xf32> to vector<8x128xf32>
    %66 = arith.mulf %61, %65 : vector<8x128xf32>
    %c0_8 = arith.constant 0 : index
    %c0_9 = arith.constant 0 : index
    %67 = vector.load %arg4[%c0_8, %c0_9] : memref<8x128xf32, #tpu.memory_space<vmem>>, vector<8x128xf32>
    tpu.vector_store %arg4[%c0_8, %c0_9], %66 {strides = array<i32>} : memref<8x128xf32, #tpu.memory_space<vmem>>, vector<8x128xf32>,
    return
  }
  func.func @transform_0(%arg0: i32) -> (i32, i32) {
    %c0_i32 = arith.constant 0 : i32
    %c0_i32_0 = arith.constant 0 : i32
    return %arg0, %c0_i32 : i32, i32
  }
  func.func @transform_1(%arg0: i32) -> (i32, i32) {
    %c0_i32 = arith.constant 0 : i32
    %c0_i32_0 = arith.constant 0 : i32
    %c0_i32_1 = arith.constant 0 : i32
    return %c0_i32, %c0_i32_0 : i32, i32
  }
  func.func @transform_2(%arg0: i32) -> (i32, i32) {
    %c0_i32 = arith.constant 0 : i32
    %c0_i32_0 = arith.constant 0 : i32
    %c0_i32_1 = arith.constant 0 : i32
    return %c0_i32, %c0_i32_0 : i32, i32
  }
  func.func @transform_3(%arg0: i32) -> (i32, i32) {
    %c0_i32 = arith.constant 0 : i32
    %c0_i32_0 = arith.constant 0 : i32
    return %arg0, %c0_i32 : i32, i32
  }
}

</mosaic_0001>

<llo_original>
// kernel: tpu_custom_call.1
$region0: #{tpu_custom_call.1}
  #allocation0 [shape = 'u32[]', space=smem, size = 0x4, offset = 0x4, fixed_abs, tag = 'smem constant byte address 0x4 - core index']
  #allocation1 [shape = 'u32[72,128]{1,0:T(1,128)}', space=vmem, size = 0x9000, scoped, tag = 'internal scratch']
  %s0 = inlined_call_operand.hbm [shape: s32[8,8], index: 0, kind: input, shape index: {}]
  %s1 = inlined_call_operand.hbm [shape: bf16[128,128], index: 1, kind: input, shape index: {}]
  %s2 = inlined_call_operand.vmem [shape: f32[1,128], index: 2, kind: input, shape index: {}]
  %s3 = inlined_call_operand.hbm [shape: f32[8,128], index: 3, kind: output, shape index: {}]
  %s4 = sld [smem:[#allocation0]]
  $region30: #{tpu_custom_call.1} parent=0
    _
  %s6 = ssub.s32 1, %s4
  %s7 = scalar_select 0, %s6, %s4
  $region1: #{tpu_custom_call.1} parent=0
    #allocation2 [shape = 'u8[4096]{0}', space=vmem, size = 0x1000, scoped, tag = 'input window, operand 0, single buffered']
    #allocation3 [shape = 's32[1]{0}', space=sflag, size = 0x4, scoped, tag = 'scoped memory for tpu_custom_call.1']
    #allocation4 [shape = 's32[1]{0}', space=sflag, size = 0x4, scoped, tag = 'scoped memory for tpu_custom_call.1']
    #allocation5 [shape = 'u8[32768]{0}', space=vmem, size = 0x8000, scoped, tag = 'input window, operand 1, single buffered']
    #allocation6 [shape = 's32[1]{0}', space=sflag, size = 0x4, scoped, tag = 'scoped memory for tpu_custom_call.1']
    #allocation7 [shape = 'u8[4096]{0}', space=vmem, size = 0x1000, scoped, tag = 'output window, operand 0, single buffered']
    %8 = vsyncpa [#allocation3], 0
    %9 = vsyncpa [#allocation6], 0
    %10 = vsyncpa [#allocation4], 0
    // Predicated region
    $region2: #{tpu_custom_call.1} parent=1 // pred_check
      _
    $region3: #{tpu_custom_call.1} parent=1 // pred_check_branch
      %12 = sbr.rel (0) target = $region5
    $region4: #{tpu_custom_call.1} parent=1 // pred_region
      %14 = vsyncadd [#allocation3], 0
      %s16 = sshll.u32 %s0, 4
      %s17 = int_to_ptr.hbm [resolvable:$true] %s16
      %s18 = sshll.u32 [#allocation2], 4
      %s19 = int_to_ptr.vmem [resolvable:$true] %s18
      %21 = dma.hbm_to_vmem [thread:$0]  %s17, 128, %s19, [#allocation3]
    $region5: #{tpu_custom_call.1} parent=1 // pred_fallthru
      _
    // Predicated region
    $region6: #{tpu_custom_call.1} parent=1 // pred_check
      _
    $region7: #{tpu_custom_call.1} parent=1 // pred_check_branch
      %23 = sbr.rel (0) target = $region9
    $region8: #{tpu_custom_call.1} parent=1 // pred_region
      %25 = vsyncadd [#allocation6], 0
      %s26 = sshll.u32 %s1, 4
      %s27 = int_to_ptr.hbm [resolvable:$true] %s26
      %s28 = sshll.u32 [#allocation5], 4
      %s29 = int_to_ptr.vmem [resolvable:$true] %s28
      %34 = dma.hbm_to_vmem [thread:$0]  %s27, 1024, %s29, [#allocation6], 64, 64, 4
    $region9: #{tpu_custom_call.1} parent=1 // pred_fallthru
      _
    // Predicated region
    $region10: #{tpu_custom_call.1} parent=1 // pred_check
      _
    $region11: #{tpu_custom_call.1} parent=1 // pred_check_branch
      %36 = sbr.rel (0) target = $region13
    $region12: #{tpu_custom_call.1} parent=1 // pred_region
      _
    $region13: #{tpu_custom_call.1} parent=1 // pred_fallthru
      _
    // Predicated region
    $region14: #{tpu_custom_call.1} parent=1 // pred_check
      _
    $region15: #{tpu_custom_call.1} parent=1 // pred_check_branch
      %38 = sbr.rel (0) target = $region17
    $region16: #{tpu_custom_call.1} parent=1 // pred_region
      %40 = dma.done [#allocation3], 128
    $region17: #{tpu_custom_call.1} parent=1 // pred_fallthru
      _
    // Predicated region
    $region18: #{tpu_custom_call.1} parent=1 // pred_check
      _
    $region19: #{tpu_custom_call.1} parent=1 // pred_check_branch
      %42 = sbr.rel (0) target = $region21
    $region20: #{tpu_custom_call.1} parent=1 // pred_region
      %44 = dma.done [#allocation6], 1024
    $region21: #{tpu_custom_call.1} parent=1 // pred_fallthru
      _
    %v45 = vld [vmem:[#allocation2] sm:$0xff]
    %v46 = vlaneseq
    %v47 = vand.u32 %v46, 127
    %48 = vset.pattern.permute.xlu0 0
    %49 = vperm.xlu0 %48, %v45
    %v50 = vpop.permute.xlu0 %49
    %vm51 = vcmp.eq.s32.totalorder %v50, %v47
    %v52 = vsel %vm51, 1, 0
    %v53 = vcvt.s32.f32 %v52
    %v54 = vadd.f32 %v53, 0.0
    %55 = vset.pattern.permute.xlu0 1
    %56 = vperm.xlu0 %55, %v45
    %v57 = vpop.permute.xlu0 %56
    %vm58 = vcmp.eq.s32.totalorder %v57, %v47
    %v59 = vsel %vm58, 1, 0
    %v60 = vcvt.s32.f32 %v59
    %v61 = vadd.f32 %v54, %v60
    %62 = vset.pattern.permute.xlu0 2
    %63 = vperm.xlu0 %62, %v45
    %v64 = vpop.permute.xlu0 %63
    %vm65 = vcmp.eq.s32.totalorder %v64, %v47
    %v66 = vsel %vm65, 1, 0
    %v67 = vcvt.s32.f32 %v66
    %v68 = vadd.f32 %v61, %v67
    %69 = vset.pattern.permute.xlu0 3
    %70 = vperm.xlu0 %69, %v45
    %v71 = vpop.permute.xlu0 %70
    %vm72 = vcmp.eq.s32.totalorder %v71, %v47
    %v73 = vsel %vm72, 1, 0
    %v74 = vcvt.s32.f32 %v73
    %v75 = vadd.f32 %v68, %v74
    %76 = vset.pattern.permute.xlu0 4
    %77 = vperm.xlu0 %76, %v45
    %v78 = vpop.permute.xlu0 %77
    %vm79 = vcmp.eq.s32.totalorder %v78, %v47
    %v80 = vsel %vm79, 1, 0
    %v81 = vcvt.s32.f32 %v80
    %v82 = vadd.f32 %v75, %v81
    %83 = vset.pattern.permute.xlu0 5
    %84 = vperm.xlu0 %83, %v45
    %v85 = vpop.permute.xlu0 %84
    %vm86 = vcmp.eq.s32.totalorder %v85, %v47
    %v87 = vsel %vm86, 1, 0
    %v88 = vcvt.s32.f32 %v87
    %v89 = vadd.f32 %v82, %v88
    %90 = vset.pattern.permute.xlu0 6
    %91 = vperm.xlu0 %90, %v45
    %v92 = vpop.permute.xlu0 %91
    %vm93 = vcmp.eq.s32.totalorder %v92, %v47
    %v94 = vsel %vm93, 1, 0
    %v95 = vcvt.s32.f32 %v94
    %v96 = vadd.f32 %v89, %v95
    %97 = vset.pattern.permute.xlu0 7
    %98 = vperm.xlu0 %97, %v45
    %v99 = vpop.permute.xlu0 %98
    %vm100 = vcmp.eq.s32.totalorder %v99, %v47
    %v101 = vsel %vm100, 1, 0
    %v102 = vcvt.s32.f32 %v101
    %v103 = vadd.f32 %v96, %v102
    %v104 = vpack.c.bf16 %v103, %v103
    %v105 = vld [vmem:[#allocation5] sm:$0xf]
    %v106 = vld [vmem:[#allocation5 + $0x4] sm:$0xf]
    %v107 = vld [vmem:[#allocation5 + $0x8] sm:$0xf]
    %v108 = vld [vmem:[#allocation5 + $0xc] sm:$0xf]
    %v109 = vld [vmem:[#allocation5 + $0x10] sm:$0xf]
    %v110 = vld [vmem:[#allocation5 + $0x14] sm:$0xf]
    %v111 = vld [vmem:[#allocation5 + $0x18] sm:$0xf]
    %v112 = vld [vmem:[#allocation5 + $0x1c] sm:$0xf]
    %v113 = vld [vmem:[#allocation5 + $0x20] sm:$0xf]
    %v114 = vld [vmem:[#allocation5 + $0x24] sm:$0xf]
    %v115 = vld [vmem:[#allocation5 + $0x28] sm:$0xf]
    %v116 = vld [vmem:[#allocation5 + $0x2c] sm:$0xf]
    %v117 = vld [vmem:[#allocation5 + $0x30] sm:$0xf]
    %v118 = vld [vmem:[#allocation5 + $0x34] sm:$0xf]
    %v119 = vld [vmem:[#allocation5 + $0x38] sm:$0xf]
    %v120 = vld [vmem:[#allocation5 + $0x3c] sm:$0xf]
    %v121 = vld [vmem:[%s2] sm:$0x1]
    %v123 = vperm.slane %v121, 0
    %v141 = vunpack.c.l.b16 %v105
    %v142 = vunpack.c.l.b16 %v106
    %v143 = vunpack.c.l.b16 %v107
    %v144 = vunpack.c.l.b16 %v108
    %v145 = vunpack.c.l.b16 %v109
    %v146 = vunpack.c.l.b16 %v110
    %v147 = vunpack.c.l.b16 %v111
    %v148 = vunpack.c.l.b16 %v112
    %v149 = vunpack.c.l.b16 %v113
    %v150 = vunpack.c.l.b16 %v114
    %v151 = vunpack.c.l.b16 %v115
    %v152 = vunpack.c.l.b16 %v116
    %v153 = vunpack.c.l.b16 %v117
    %v154 = vunpack.c.l.b16 %v118
    %v155 = vunpack.c.l.b16 %v119
    %v156 = vunpack.c.l.b16 %v120
    %v157 = vpack.c.b16 %v142, %v141
    %v158 = vpack.c.b16 %v144, %v143
    %v159 = vpack.c.b16 %v146, %v145
    %v160 = vpack.c.b16 %v148, %v147
    %v161 = vpack.c.b16 %v150, %v149
    %v162 = vpack.c.b16 %v152, %v151
    %v163 = vpack.c.b16 %v154, %v153
    %v164 = vpack.c.b16 %v156, %v155
    %173 = vmatpush.bf16.msra.mxu0 %v164
    %174 = vmatpush.bf16.msra.mxu0 %v163
    %175 = vmatpush.bf16.msra.mxu0 %v162
    %176 = vmatpush.bf16.msra.mxu0 %v161
    %177 = vmatpush.bf16.msra.mxu0 %v160
    %178 = vmatpush.bf16.msra.mxu0 %v159
    %179 = vmatpush.bf16.msra.mxu0 %v158
    %180 = vmatpush.bf16.msra.mxu0 %v157
    %181 = vmatmul.bf16.gmra.mxu0 %v104
    %v182 = vpop.f32.mrf.mxu0
    %v183 = vadd.f32 %v123, %v182
    %v184 = vpop.f32.mrf.mxu0
    %185 = vdwg.mxu0
    %186 = vmax.xlane.f32.xlu0 %v183
    %v187 = vpop.xlane.xlu0 %186
    %v188 = vsub.f32 %v183, %v187
    %v189 = vmul.f32 %v188, 1.442695
    %v190 = vpow.pop %v189
    %191 = vadd.xlane.f32.xlu0 %v190
    %v192 = vpop.xlane.xlu0 %191
    %v193 = vrcp.pop %v192
    %v194 = vmul.f32 %v190, %v193
    %195 = vst [vmem:[#allocation7] sm:$0xff] %v194
    // Predicated region
    $region22: #{tpu_custom_call.1} parent=1 // pred_check
      _
    $region23: #{tpu_custom_call.1} parent=1 // pred_check_branch
      %197 = sbr.rel (0) target = $region25
    $region24: #{tpu_custom_call.1} parent=1 // pred_region
      %199 = vsyncadd [#allocation4], 0
      %s201 = sshll.u32 [#allocation7], 4
      %s202 = int_to_ptr.vmem [resolvable:$true] %s201
      %s203 = sshll.u32 %s3, 4
      %s204 = int_to_ptr.hbm [resolvable:$true] %s203
      %206 = dma.vmem_to_hbm [thread:$0]  %s202, 128, %s204, [#allocation4]
    $region25: #{tpu_custom_call.1} parent=1 // pred_fallthru
      _
    // Predicated region
    $region26: #{tpu_custom_call.1} parent=1 // pred_check
      _
    $region27: #{tpu_custom_call.1} parent=1 // pred_check_branch
      %208 = sbr.rel (0) target = $region29
    $region28: #{tpu_custom_call.1} parent=1 // pred_region
      %210 = dma.done [#allocation4], 128
    $region29: #{tpu_custom_call.1} parent=1 // pred_fallthru
      _
    %211 = vsyncpa [#allocation3], 1
    %212 = vsyncpa [#allocation6], 1
    %213 = vsyncpa [#allocation4], 1

</llo_original>
